<compile_context>
chip_gen: v7x
topology: tpu7x:2x2x1
jax: 0.10.0
libtpu: 0.0.40
codegen_flags: <defaults>
</compile_context>

<pallas_src>
import math

import jax
import jax.numpy as jnp
from jax.experimental import pallas as pl
from jax.experimental.pallas import tpu as pltpu


def _copy_kernel(x_ref, o_ref):
    # Identity copy of the current tile; the reshape itself is metadata-only
    # and handled outside the kernel.
    o_ref[...] = x_ref[...]


def _plan(n: int, c: int, itemsize: int):
    """Pick a lane-dense 2D slab (rows, cols) and a row tile tm for the copy.

    Returns (rows, cols, tm) with rows * cols == n * c and rows % tm == 0.
    Falls back to a full-array block (always legal) when no clean tiling
    exists.
    """
    rows, cols = n, c

    # Lane-dense relayout: a narrow C wastes lanes / forces masked stores on
    # v5e.  If the total element count is a multiple of one 32-bit vreg tile
    # (8 * 128), present the data as (total/128, 128) instead.
    if c % 128 != 0 and (n * c) % 1024 == 0:
        rows, cols = (n * c) // 128, 128

    # Sublane quantum per dtype width (8 for 32-bit, 16 for 16-bit, 32 for 8-bit).
    sub = 32 // itemsize if itemsize in (1, 2, 4) else 8

    # Keep each block <= ~4 MiB so 2 (in/out) x 2 (double buffer) blocks stay
    # well under every chip's scoped VMEM default.
    target_elems = (4 * 1024 * 1024) // itemsize

    tm = rows
    if rows * cols > target_elems and rows % sub == 0:
        tm = max(sub, (target_elems // max(cols, 1)) // sub * sub)
        # Shrink to an exact divisor of rows (grid must cover rows exactly).
        while tm > sub and rows % tm:
            tm -= sub
        if tm <= 0 or rows % tm:
            tm = rows  # full-array block: always legal, just less pipelined
    return rows, cols, tm


def unflatten(x: jax.Array, type: str = "3d") -> jax.Array:
    """Pallas implementation of UnFlatten.forward.

    x: array whose leading dim is the batch; trailing dims collapse to C
       (matching torch.view semantics for (N, C[, 1, ...]) inputs).
       Returns (N, C, 1, 1, 1) for type='3d', else (N, C, 1, 1).
    """
    n = x.shape[0]
    c = math.prod(x.shape[1:]) if x.ndim > 1 else 1

    rows, cols, tm = _plan(n, c, x.dtype.itemsize)
    x2d = x.reshape(rows, cols)

    out2d = pl.pallas_call(
        _copy_kernel,
        out_shape=jax.ShapeDtypeStruct((rows, cols), x2d.dtype),
        grid=(rows // tm,),
        in_specs=[pl.BlockSpec((tm, cols), lambda i: (i, 0))],
        out_specs=pl.BlockSpec((tm, cols), lambda i: (i, 0)),
        input_output_aliases={0: 0},
        compiler_params=pltpu.CompilerParams(
            dimension_semantics=("parallel",),
        ),
    )(x2d)

    if type == "3d":
        return out2d.reshape(n, c, 1, 1, 1)
    return out2d.reshape(n, c, 1, 1)


if __name__ == "__main__":
    key = jax.random.PRNGKey(0)

    # Small shapes consistent with the module: a flat (batch, channels) input.
    N, C = 2, 32
    x = jax.random.normal(key, (N, C), dtype=jnp.float32)

    y3d = unflatten(x, type="3d")
    y2d = unflatten(x, type="2d")
    jax.block_until_ready(y3d)
    jax.block_until_ready(y2d)

    assert y3d.shape == (N, C, 1, 1, 1), y3d.shape
    assert y2d.shape == (N, C, 1, 1), y2d.shape
    assert jnp.allclose(y3d.reshape(N, C), x)
    assert jnp.allclose(y2d.reshape(N, C), x)

    # A lane-dense-relayout path (N*C multiple of 8*128, C not multiple of 128).
    N2, C2 = 16, 64  # 1024 elems -> relayouts to (8, 128)
    x2 = jax.random.normal(jax.random.PRNGKey(1), (N2, C2), dtype=jnp.float32)
    y2 = unflatten(x2, type="3d")
    jax.block_until_ready(y2)
    assert y2.shape == (N2, C2, 1, 1, 1), y2.shape
    assert jnp.allclose(y2.reshape(N2, C2), x2)

    print("KERNEL_OK")
</pallas_src>

<mosaic_0001>
module attributes {stable_mosaic.version = 11 : i64} {
  func.func @_copy_kernel(%arg0: i32, %arg1: memref<2x32xf32, #tpu.memory_space<vmem>>, %arg2: memref<2x32xf32, #tpu.memory_space<vmem>>) attributes {dimension_semantics = [#tpu.dimension_semantics<parallel>], iteration_bounds = array<i64: 1>, scalar_prefetch = 0 : i64, scratch_operands = 0 : i64, tpu.core_type = #tpu.core_type<tc>, window_params = [{transform_indices = @transform_0, window_bounds = array<i64: 2, 32>}, {transform_indices = @transform_1, window_bounds = array<i64: 2, 32>}]} {
    %c0 = arith.constant 0 : index
    %c0_0 = arith.constant 0 : index
    %0 = vector.load %arg1[%c0, %c0_0] : memref<2x32xf32, #tpu.memory_space<vmem>>, vector<2x32xf32>
    %c0_1 = arith.constant 0 : index
    %c0_2 = arith.constant 0 : index
    %1 = vector.load %arg2[%c0_1, %c0_2] : memref<2x32xf32, #tpu.memory_space<vmem>>, vector<2x32xf32>
    tpu.vector_store %arg2[%c0_1, %c0_2], %0 {strides = array<i32>} : memref<2x32xf32, #tpu.memory_space<vmem>>, vector<2x32xf32>,
    return
  }
  func.func @transform_0(%arg0: i32) -> (i32, i32) {
    %c0_i32 = arith.constant 0 : i32
    %c0_i32_0 = arith.constant 0 : i32
    return %arg0, %c0_i32 : i32, i32
  }
  func.func @transform_1(%arg0: i32) -> (i32, i32) {
    %c0_i32 = arith.constant 0 : i32
    %c0_i32_0 = arith.constant 0 : i32
    return %arg0, %c0_i32 : i32, i32
  }
}

</mosaic_0001>

<llo_original>
// kernel: tpu_custom_call.1
$region0: #{tpu_custom_call.1}
  #allocation0 [shape = 'u32[]', space=smem, size = 0x4, offset = 0x4, fixed_abs, tag = 'smem constant byte address 0x4 - core index']
  #allocation1 [shape = 'u32[144,128]{1,0:T(1,128)}', space=vmem, size = 0x12000, scoped, tag = 'internal scratch']
  %s0 = inlined_call_operand.hbm [shape: f32[2,32], index: 0, kind: input, shape index: {}, may-alias: {0,1}]
  %s1 = inlined_call_operand.hbm [shape: f32[2,32], index: 1, kind: output, shape index: {}, may-alias: {0,1}]
  %s2 = sld [smem:[#allocation0]]
  $region18: #{tpu_custom_call.1} parent=0
    _
  %s4 = ssub.s32 1, %s2
  %s5 = scalar_select 0, %s4, %s2
  $region1: #{tpu_custom_call.1} parent=0
    #allocation2 [shape = 'u8[1024]{0}', space=vmem, size = 0x400, scoped, tag = 'input window, operand 0, single buffered']
    #allocation3 [shape = 's32[1]{0}', space=sflag, size = 0x4, scoped, tag = 'scoped memory for tpu_custom_call.1']
    #allocation4 [shape = 's32[1]{0}', space=sflag, size = 0x4, scoped, tag = 'scoped memory for tpu_custom_call.1']
    #allocation5 [shape = 'u8[1024]{0}', space=vmem, size = 0x400, scoped, tag = 'output window, operand 0, single buffered']
    %6 = vsyncpa [#allocation3], 0
    %7 = vsyncpa [#allocation4], 0
    // Predicated region
    $region2: #{tpu_custom_call.1} parent=1 // pred_check
      _
    $region3: #{tpu_custom_call.1} parent=1 // pred_check_branch
      %9 = sbr.rel (0) target = $region5
    $region4: #{tpu_custom_call.1} parent=1 // pred_region
      %s11 = ssub.s32 32, 32
      %12 = vsyncadd [#allocation3], %s11
      %s14 = sshll.u32 [#allocation2], 4
      %s15 = int_to_ptr.vmem [resolvable:$true] %s14
      %17 = dma.hbm_to_vmem [thread:$0]  %s0, 32, %s15, [#allocation3]
    $region5: #{tpu_custom_call.1} parent=1 // pred_fallthru
      _
    // Predicated region
    $region6: #{tpu_custom_call.1} parent=1 // pred_check
      _
    $region7: #{tpu_custom_call.1} parent=1 // pred_check_branch
      %19 = sbr.rel (0) target = $region9
    $region8: #{tpu_custom_call.1} parent=1 // pred_region
      %20 = dma.done [#allocation3], 32
    $region9: #{tpu_custom_call.1} parent=1 // pred_fallthru
      _
    %v21 = vld [vmem:[#allocation2] sm:$0x3]
    %vm22 = vcmask 254976
    %23 = vst.msk [vmem:[#allocation5] sm:$0x3] %vm22, %v21
    // Predicated region
    $region10: #{tpu_custom_call.1} parent=1 // pred_check
      _
    $region11: #{tpu_custom_call.1} parent=1 // pred_check_branch
      %25 = sbr.rel (0) target = $region13
    $region12: #{tpu_custom_call.1} parent=1 // pred_region
      %s27 = ssub.s32 32, 32
      %28 = vsyncadd [#allocation4], %s27
      %s30 = sshll.u32 [#allocation5], 4
      %s31 = int_to_ptr.vmem [resolvable:$true] %s30
      %33 = dma.vmem_to_hbm [thread:$0]  %s31, 32, %s1, [#allocation4]
    $region13: #{tpu_custom_call.1} parent=1 // pred_fallthru
      _
    // Predicated region
    $region14: #{tpu_custom_call.1} parent=1 // pred_check
      _
    $region15: #{tpu_custom_call.1} parent=1 // pred_check_branch
      %35 = sbr.rel (0) target = $region17
    $region16: #{tpu_custom_call.1} parent=1 // pred_region
      %36 = dma.done [#allocation4], 32
    $region17: #{tpu_custom_call.1} parent=1 // pred_fallthru
      _
    %37 = vsyncpa [#allocation3], 1
    %38 = vsyncpa [#allocation4], 1

</llo_original>
